<compile_context>
chip_gen: v6e
topology: v6e:2x2x1
jax: 0.10.0
libtpu: 0.0.40
codegen_flags: <defaults>
</compile_context>

<pallas_src>
import jax
import jax.numpy as jnp
from jax.experimental import pallas as pl
from jax.experimental.pallas import tpu as pltpu


def _copy_kernel(x_ref, o_ref):
    # Pure identity on a lane-dense (tile_r, lane) VMEM tile.
    o_ref[...] = x_ref[...]


def pseudo_height_compression_copy(x: jax.Array) -> jax.Array:
    """Physical copy of `x` via a lane-dense tiled Pallas kernel.

    Only needed if downstream code requires a distinct buffer; the module
    semantics themselves are a pure alias (see `forward`).
    """
    orig_shape = x.shape
    total = int(x.size)
    itemsize = jnp.dtype(x.dtype).itemsize

    # Lane-dense flattened view: lane = 512 (multiple of 128), rows tiled in
    # chunks of up to 512 (multiple of 8).  Small inputs collapse to a single
    # tile whose row count is rounded up to a multiple of 8.
    lane = 512
    tile_r = 512
    rows = -(-total // lane)                      # ceil-div
    if rows < tile_r:
        tile_r = max(8, ((rows + 7) // 8) * 8)    # multiple of 8, one tile
    rows_p = -(-rows // tile_r) * tile_r          # pad rows to tile multiple
    padded_total = rows_p * lane

    flat = x.reshape(-1)
    if padded_total != total:
        flat = jnp.pad(flat, (0, padded_total - total))
    x2d = flat.reshape(rows_p, lane)

    grid = (rows_p // tile_r,)

    out2d = pl.pallas_call(
        _copy_kernel,
        out_shape=jax.ShapeDtypeStruct((rows_p, lane), x.dtype),
        grid_spec=pltpu.PrefetchScalarGridSpec(
            num_scalar_prefetch=0,
            grid=grid,
            in_specs=[pl.BlockSpec((tile_r, lane), lambda i: (i, 0))],
            out_specs=pl.BlockSpec((tile_r, lane), lambda i: (i, 0)),
        ),
        compiler_params=pltpu.CompilerParams(
            dimension_semantics=("parallel",),
        ),
        cost_estimate=pl.CostEstimate(
            flops=0,
            transcendentals=0,
            bytes_accessed=2 * padded_total * itemsize,
        ),
    )(x2d)

    out_flat = out2d.reshape(-1)
    if padded_total != total:
        out_flat = out_flat[:total]
    return out_flat.reshape(orig_shape)


def forward(batch_dict: dict) -> dict:
    """Mirrors PseudoHeightCompression.forward on a dict of JAX arrays.

    Exact PyTorch semantics: a pure alias.  JAX arrays are immutable, so
    aliasing is semantically identical to the PyTorch assignment and costs
    zero HBM traffic — no kernel is launched on the hot path.
    """
    batch_dict["spatial_features"] = batch_dict["spatial_features_2d"]
    return batch_dict


class ModelCfg:
    # Module __init__ only stores NUM_BEV_FEATURES; no parameters are created.
    NUM_BEV_FEATURES = 4


if __name__ == "__main__":
    key = jax.random.PRNGKey(0)
    # Small NCHW input consistent with a BEV feature map:
    # (batch=2, C=4, H=16, W=16)
    x = jax.random.normal(
        key, (2, ModelCfg.NUM_BEV_FEATURES, 16, 16), dtype=jnp.float32
    )

    # --- Module forward: pure alias (the fast path) ---------------------
    batch_dict = {"spatial_features_2d": x}
    batch_dict = forward(batch_dict)
    aliased = jax.block_until_ready(batch_dict["spatial_features"])
    assert aliased.shape == x.shape and aliased.dtype == x.dtype
    assert bool(jnp.array_equal(aliased, x))

    # --- Optional physical-copy Pallas kernel (exercised for validation) --
    copied = jax.block_until_ready(pseudo_height_compression_copy(x))
    assert copied.shape == x.shape and copied.dtype == x.dtype
    assert bool(jnp.array_equal(copied, x))

    print("KERNEL_OK")
</pallas_src>

<mosaic_0001>
module attributes {stable_mosaic.version = 11 : i64} {
  func.func @_copy_kernel(%arg0: i32, %arg1: memref<8x512xf32, #tpu.memory_space<vmem>>, %arg2: memref<8x512xf32, #tpu.memory_space<vmem>>) attributes {dimension_semantics = [#tpu.dimension_semantics<parallel>], iteration_bounds = array<i64: 1>, scalar_prefetch = 0 : i64, scratch_operands = 0 : i64, tpu.core_type = #tpu.core_type<tc>, window_params = [{transform_indices = @transform_0, window_bounds = array<i64: 8, 512>}, {transform_indices = @transform_1, window_bounds = array<i64: 8, 512>}]} {
    %c0 = arith.constant 0 : index
    %c0_0 = arith.constant 0 : index
    %0 = vector.load %arg1[%c0, %c0_0] : memref<8x512xf32, #tpu.memory_space<vmem>>, vector<8x512xf32>
    %c0_1 = arith.constant 0 : index
    %c0_2 = arith.constant 0 : index
    %1 = vector.load %arg2[%c0_1, %c0_2] : memref<8x512xf32, #tpu.memory_space<vmem>>, vector<8x512xf32>
    tpu.vector_store %arg2[%c0_1, %c0_2], %0 {strides = array<i32>} : memref<8x512xf32, #tpu.memory_space<vmem>>, vector<8x512xf32>,
    return
  }
  func.func @transform_0(%arg0: i32) -> (i32, i32) {
    %c0_i32 = arith.constant 0 : i32
    %c0_i32_0 = arith.constant 0 : i32
    return %arg0, %c0_i32 : i32, i32
  }
  func.func @transform_1(%arg0: i32) -> (i32, i32) {
    %c0_i32 = arith.constant 0 : i32
    %c0_i32_0 = arith.constant 0 : i32
    return %arg0, %c0_i32 : i32, i32
  }
}

</mosaic_0001>

<llo_original>
// kernel: tpu_custom_call.1
$region0: #{tpu_custom_call.1}
  #allocation0 [shape = 'u32[]', space=smem, size = 0x4, offset = 0x4, fixed_abs, tag = 'smem constant byte address 0x4 - core index']
  #allocation1 [shape = 'u32[144,128]{1,0:T(1,128)}', space=vmem, size = 0x12000, scoped, tag = 'internal scratch']
  %s0 = inlined_call_operand.hbm [shape: f32[8,512], index: 0, kind: input, shape index: {}]
  %s1 = inlined_call_operand.hbm [shape: f32[8,512], index: 1, kind: output, shape index: {}]
  %s2 = sld [smem:[#allocation0]]
  $region18: #{tpu_custom_call.1} parent=0
    _
  %s4 = ssub.s32 1, %s2
  %s5 = scalar_select 0, %s4, %s2
  $region1: #{tpu_custom_call.1} parent=0
    #allocation2 [shape = 'u8[16384]{0}', space=vmem, size = 0x4000, scoped, tag = 'input window, operand 0, single buffered']
    #allocation3 [shape = 's32[1]{0}', space=sflag, size = 0x4, scoped, tag = 'scoped memory for tpu_custom_call.1']
    #allocation4 [shape = 's32[1]{0}', space=sflag, size = 0x4, scoped, tag = 'scoped memory for tpu_custom_call.1']
    #allocation5 [shape = 'u8[16384]{0}', space=vmem, size = 0x4000, scoped, tag = 'output window, operand 0, single buffered']
    %6 = vsyncpa [#allocation3], 0
    %7 = vsyncpa [#allocation4], 0
    // Predicated region
    $region2: #{tpu_custom_call.1} parent=1 // pred_check
      _
    $region3: #{tpu_custom_call.1} parent=1 // pred_check_branch
      %9 = sbr.rel (0) target = $region5
    $region4: #{tpu_custom_call.1} parent=1 // pred_region
      %s11 = ssub.s32 512, 512
      %12 = vsyncadd [#allocation3], %s11
      %s14 = sshll.u32 [#allocation2], 4
      %s15 = int_to_ptr.vmem [resolvable:$true] %s14
      %17 = dma.hbm_to_vmem [thread:$0]  %s0, 512, %s15, [#allocation3]
    $region5: #{tpu_custom_call.1} parent=1 // pred_fallthru
      _
    // Predicated region
    $region6: #{tpu_custom_call.1} parent=1 // pred_check
      _
    $region7: #{tpu_custom_call.1} parent=1 // pred_check_branch
      %19 = sbr.rel (0) target = $region9
    $region8: #{tpu_custom_call.1} parent=1 // pred_region
      %20 = dma.done [#allocation3], 512
    $region9: #{tpu_custom_call.1} parent=1 // pred_fallthru
      _
    %v21 = vld [vmem:[#allocation2] sm:$0xff]
    %v22 = vld [vmem:[#allocation2 + $0x8] sm:$0xff]
    %v23 = vld [vmem:[#allocation2 + $0x10] sm:$0xff]
    %v24 = vld [vmem:[#allocation2 + $0x18] sm:$0xff]
    %25 = vst [vmem:[#allocation5] sm:$0xff] %v21
    %26 = vst [vmem:[#allocation5 + $0x8] sm:$0xff] %v22
    %27 = vst [vmem:[#allocation5 + $0x10] sm:$0xff] %v23
    %28 = vst [vmem:[#allocation5 + $0x18] sm:$0xff] %v24
    // Predicated region
    $region10: #{tpu_custom_call.1} parent=1 // pred_check
      _
    $region11: #{tpu_custom_call.1} parent=1 // pred_check_branch
      %30 = sbr.rel (0) target = $region13
    $region12: #{tpu_custom_call.1} parent=1 // pred_region
      %s32 = ssub.s32 512, 512
      %33 = vsyncadd [#allocation4], %s32
      %s35 = sshll.u32 [#allocation5], 4
      %s36 = int_to_ptr.vmem [resolvable:$true] %s35
      %38 = dma.vmem_to_hbm [thread:$0]  %s36, 512, %s1, [#allocation4]
    $region13: #{tpu_custom_call.1} parent=1 // pred_fallthru
      _
    // Predicated region
    $region14: #{tpu_custom_call.1} parent=1 // pred_check
      _
    $region15: #{tpu_custom_call.1} parent=1 // pred_check_branch
      %40 = sbr.rel (0) target = $region17
    $region16: #{tpu_custom_call.1} parent=1 // pred_region
      %41 = dma.done [#allocation4], 512
    $region17: #{tpu_custom_call.1} parent=1 // pred_fallthru
      _
    %42 = vsyncpa [#allocation3], 1
    %43 = vsyncpa [#allocation4], 1

</llo_original>
